<compile_context>
chip_gen: v6e
topology: v6e:2x2x1
jax: 0.10.0
libtpu: 0.0.40
codegen_flags: <defaults>
</compile_context>

<pallas_src>
import functools

import jax
import jax.numpy as jnp
from jax.experimental import pallas as pl
from jax.experimental.pallas import tpu as pltpu

_LANES = 128
_OUT_SUBLANES = 8  # output tile padded to a full (8, 128) vreg for layout


def _dice_kernel(p_ref, t_ref, loss_ref, num_acc, den_acc, *,
                 smooth, power, block_rows, valid_rows_last, acc_rows):
    r = pl.program_id(1)
    last = pl.num_programs(1) - 1

    @pl.when(r == 0)
    def _init():
        num_acc[...] = jnp.zeros_like(num_acc)
        den_acc[...] = jnp.zeros_like(den_acc)

    def _fold(x):
        # Partial reduction of (block_rows, 128) down to the accumulator
        # shape.  When block_rows is a multiple of 8 this is pure vreg adds
        # (sublane/lane fold deferred to finalize); otherwise (single tiny
        # tile) fall back to a plain axis-0 sum.
        if acc_rows == 8:
            return jnp.sum(x.reshape(-1, 8, _LANES), axis=0)
        return jnp.sum(x, axis=0, keepdims=True)

    def _accumulate(p, t):
        num_acc[...] += _fold(p * t)
        if power == 2:
            s = p + t
            den_acc[...] += _fold(s * s)          # holds sum((p+t)^2)
        else:
            den_acc[...] += _fold(p ** power + t ** power)

    ragged = valid_rows_last != block_rows
    if ragged:
        # Hot path: full blocks, no masking work at all.
        @pl.when(r != last)
        def _full():
            _accumulate(p_ref[0].astype(jnp.float32),
                        t_ref[0].astype(jnp.float32))

        # Cold path (once per sample): zero the overhanging rows of the last
        # partial block before they can reach either accumulator.
        @pl.when(r == last)
        def _tail():
            p = p_ref[0].astype(jnp.float32)
            t = t_ref[0].astype(jnp.float32)
            row = jax.lax.broadcasted_iota(jnp.int32, p.shape, 0)
            keep = row < valid_rows_last
            _accumulate(jnp.where(keep, p, 0.0), jnp.where(keep, t, 0.0))
    else:
        _accumulate(p_ref[0].astype(jnp.float32),
                    t_ref[0].astype(jnp.float32))

    @pl.when(r == last)
    def _finalize():
        num = jnp.sum(num_acc[...])
        den = jnp.sum(den_acc[...])
        if power == 2:
            # den_acc holds sum((p+t)^2) = sum(p^2) + sum(t^2) + 2*sum(p*t).
            den = den - 2.0 * num
        loss = 1.0 - (num + jnp.float32(smooth)) / (den + jnp.float32(smooth))
        loss_ref[...] = jnp.full(loss_ref.shape, loss, dtype=loss_ref.dtype)


def binary_dice_loss(predict, target, *, smooth=1.0, p=2, reduction="mean",
                     block_rows=None):
    assert predict.shape[0] == target.shape[0], (
        "predict & target batch size don't match")
    assert p > 0, "zero-padding the feature axis requires p > 0"
    n = predict.shape[0]
    # Flatten [N, *] -> [N, D] (same as .contiguous().view(N, -1)).
    predict = predict.reshape(n, -1)
    target = target.reshape(n, -1)
    d = predict.shape[1]

    # Pad the feature axis only up to the next multiple of 128 lanes (zeros
    # contribute nothing to either sum for p > 0).
    d128 = pl.cdiv(d, _LANES) * _LANES
    if d128 != d:
        pad = [(0, 0), (0, d128 - d)]
        predict = jnp.pad(predict, pad)
        target = jnp.pad(target, pad)
    rows = d128 // _LANES

    # Lane/sublane-dense 3-D layout (free reshape of a contiguous array).
    predict = predict.reshape(n, rows, _LANES)
    target = target.reshape(n, rows, _LANES)

    itemsize_sum = predict.dtype.itemsize + target.dtype.itemsize
    # dtype-aware sublane packing: 8 rows (f32), 16 (bf16), 32 (int8/fp8).
    sub = max(8, 32 // min(predict.dtype.itemsize, target.dtype.itemsize))

    if block_rows is None:
        # ~8 MiB of input traffic per grid step (8192 rows f32, 16384 bf16).
        block_rows = (8 << 20) // (_LANES * itemsize_sum)
    # Cap so 2 inputs x 2 pipeline buffers stay within ~32 MiB of VMEM
    # (v7x: 64 MiB physical / 32 MiB default scoped per core).
    max_rows = (32 << 20) // (2 * _LANES * itemsize_sum)
    block_rows = max(sub, min(int(block_rows), max_rows))

    if rows <= block_rows:
        r_blk = rows                 # full extent: no divisibility constraint
    else:
        r_blk = max(sub, (block_rows // sub) * sub)
    grid_rows = pl.cdiv(rows, r_blk)
    valid_rows_last = rows - (grid_rows - 1) * r_blk
    acc_rows = 8 if r_blk % 8 == 0 else 1

    kernel = functools.partial(
        _dice_kernel, smooth=float(smooth), power=p,
        block_rows=r_blk, valid_rows_last=valid_rows_last, acc_rows=acc_rows)

    # Scoped VMEM: double-buffered input blocks + output/scratch + slack.
    vmem_needed = 2 * r_blk * _LANES * itemsize_sum + (1 << 20)
    vmem_limit = int(min(max(32 << 20, vmem_needed + (8 << 20)), 48 << 20))

    cost = pl.CostEstimate(
        flops=5 * n * rows * _LANES,
        transcendentals=0,
        bytes_accessed=n * rows * _LANES * itemsize_sum
        + n * _OUT_SUBLANES * _LANES * 4)

    out = pl.pallas_call(
        kernel,
        out_shape=jax.ShapeDtypeStruct((n, _OUT_SUBLANES, _LANES),
                                       jnp.float32),
        grid=(n, grid_rows),
        in_specs=[
            pl.BlockSpec((1, r_blk, _LANES), lambda i, r: (i, r, 0)),
            pl.BlockSpec((1, r_blk, _LANES), lambda i, r: (i, r, 0)),
        ],
        out_specs=pl.BlockSpec((1, _OUT_SUBLANES, _LANES),
                               lambda i, r: (i, 0, 0)),
        scratch_shapes=[
            pltpu.VMEM((acc_rows, _LANES), jnp.float32),
            pltpu.VMEM((acc_rows, _LANES), jnp.float32),
        ],
        compiler_params=pltpu.CompilerParams(
            dimension_semantics=("parallel", "arbitrary"),
            vmem_limit_bytes=vmem_limit),
        cost_estimate=cost,
    )(predict, target)

    loss = out[:, 0, 0]  # shape [N]
    if reduction == "mean":
        return jnp.mean(loss)
    elif reduction == "sum":
        return jnp.sum(loss)
    elif reduction == "none":
        return loss
    else:
        raise Exception("Unexpected reduction {}".format(reduction))


def _reference(predict, target, smooth=1.0, p=2, reduction="mean"):
    n = predict.shape[0]
    pr = predict.reshape(n, -1).astype(jnp.float32)
    tg = target.reshape(n, -1).astype(jnp.float32)
    num = jnp.sum(pr * tg, axis=1) + smooth
    den = jnp.sum(pr ** p + tg ** p, axis=1) + smooth
    loss = 1.0 - num / den
    if reduction == "mean":
        return jnp.mean(loss)
    if reduction == "sum":
        return jnp.sum(loss)
    return loss


if __name__ == "__main__":
    key = jax.random.PRNGKey(0)
    kp, kt, kp2, kt2, kp3, kt3 = jax.random.split(key, 6)

    # Case 1: small NCHW, 128-aligned feature dim (D = 1024), single row-tile.
    N, C, H, W = 2, 4, 16, 16
    predict = jax.nn.sigmoid(
        jax.random.normal(kp, (N, C, H, W), dtype=jnp.float32))
    target = (jax.random.uniform(kt, (N, C, H, W)) > 0.5).astype(jnp.float32)

    out = binary_dice_loss(predict, target, smooth=1.0, p=2, reduction="mean")
    out = jax.block_until_ready(out)
    ref = _reference(predict, target, smooth=1.0, p=2, reduction="mean")
    assert jnp.allclose(out, ref, rtol=1e-5, atol=1e-5), (out, ref)

    # Case 2: ragged shapes (D not a multiple of 128) + multi-tile reduction
    # axis (force small block_rows) to exercise the gated tail masking.
    predict2 = jax.nn.sigmoid(
        jax.random.normal(kp2, (2, 3, 17, 31), dtype=jnp.float32))
    target2 = (jax.random.uniform(kt2, (2, 3, 17, 31)) > 0.5).astype(
        jnp.float32)
    out2 = binary_dice_loss(predict2, target2, smooth=1.0, p=2,
                            reduction="none", block_rows=8)
    out2 = jax.block_until_ready(out2)
    ref2 = _reference(predict2, target2, smooth=1.0, p=2, reduction="none")
    assert jnp.allclose(out2, ref2, rtol=1e-5, atol=1e-5), (out2, ref2)

    # Case 3: bf16 inputs (dtype-aware block rounding / in-kernel f32 cast).
    predict3 = jax.nn.sigmoid(
        jax.random.normal(kp3, (N, C, H, W), dtype=jnp.float32)
    ).astype(jnp.bfloat16)
    target3 = (jax.random.uniform(kt3, (N, C, H, W)) > 0.5).astype(
        jnp.bfloat16)
    out3 = binary_dice_loss(predict3, target3, smooth=1.0, p=2,
                            reduction="sum")
    out3 = jax.block_until_ready(out3)
    ref3 = _reference(predict3, target3, smooth=1.0, p=2, reduction="sum")
    assert jnp.allclose(out3, ref3, rtol=1e-4, atol=1e-4), (out3, ref3)

    print("KERNEL_OK")
</pallas_src>

<mosaic_0001>
module attributes {stable_mosaic.version = 11 : i64} {
  func.func @_dice_kernel(%arg0: i32, %arg1: i32, %arg2: memref<1x8x128xf32, #tpu.memory_space<vmem>>, %arg3: memref<1x8x128xf32, #tpu.memory_space<vmem>>, %arg4: memref<1x8x128xf32, #tpu.memory_space<vmem>>, %arg5: memref<8x128xf32, #tpu.memory_space<vmem>>, %arg6: memref<8x128xf32, #tpu.memory_space<vmem>>) attributes {dimension_semantics = [#tpu.dimension_semantics<parallel>, #tpu.dimension_semantics<arbitrary>], iteration_bounds = array<i64: 2, 1>, scalar_prefetch = 0 : i64, scratch_operands = 2 : i64, tpu.core_type = #tpu.core_type<tc>, window_params = [{transform_indices = @transform_0, window_bounds = array<i64: 1, 8, 128>}, {transform_indices = @transform_1, window_bounds = array<i64: 1, 8, 128>}, {transform_indices = @transform_2, window_bounds = array<i64: 1, 8, 128>}]} {
    %c0_i32 = arith.constant 0 : i32
    %0 = arith.cmpi eq, %arg1, %c0_i32 : i32
    %1 = arith.extui %0 : i1 to i32
    %c0_i32_0 = arith.constant 0 : i32
    %2 = arith.cmpi ne, %1, %c0_i32_0 : i32
    scf.if %2 {
      %cst_17 = arith.constant 0.000000e+00 : f32
      %23 = vector.broadcast %cst_17 : f32 to vector<8x128xf32>
      %c0_18 = arith.constant 0 : index
      %c0_19 = arith.constant 0 : index
      %24 = vector.load %arg5[%c0_18, %c0_19] : memref<8x128xf32, #tpu.memory_space<vmem>>, vector<8x128xf32>
      tpu.vector_store %arg5[%c0_18, %c0_19], %23 {strides = array<i32>} : memref<8x128xf32, #tpu.memory_space<vmem>>, vector<8x128xf32>,
      %cst_20 = arith.constant 0.000000e+00 : f32
      %25 = vector.broadcast %cst_20 : f32 to vector<8x128xf32>
      %c0_21 = arith.constant 0 : index
      %c0_22 = arith.constant 0 : index
      %26 = vector.load %arg6[%c0_21, %c0_22] : memref<8x128xf32, #tpu.memory_space<vmem>>, vector<8x128xf32>
      tpu.vector_store %arg6[%c0_21, %c0_22], %25 {strides = array<i32>} : memref<8x128xf32, #tpu.memory_space<vmem>>, vector<8x128xf32>,
    } else {
    }
    %c0 = arith.constant 0 : index
    %c0_1 = arith.constant 0 : index
    %c0_2 = arith.constant 0 : index
    %3 = vector.load %arg2[%c0, %c0_1, %c0_2] : memref<1x8x128xf32, #tpu.memory_space<vmem>>, vector<1x8x128xf32>
    %4 = vector.shape_cast %3 : vector<1x8x128xf32> to vector<8x128xf32>
    %c0_3 = arith.constant 0 : index
    %c0_4 = arith.constant 0 : index
    %c0_5 = arith.constant 0 : index
    %5 = vector.load %arg3[%c0_3, %c0_4, %c0_5] : memref<1x8x128xf32, #tpu.memory_space<vmem>>, vector<1x8x128xf32>
    %6 = vector.shape_cast %5 : vector<1x8x128xf32> to vector<8x128xf32>
    %c0_6 = arith.constant 0 : index
    %c0_7 = arith.constant 0 : index
    %7 = vector.load %arg5[%c0_6, %c0_7] : memref<8x128xf32, #tpu.memory_space<vmem>>, vector<8x128xf32>
    %8 = arith.mulf %4, %6 : vector<8x128xf32>
    %9 = vector.shape_cast %8 : vector<8x128xf32> to vector<1x8x128xf32>
    %cst = arith.constant dense<0.000000e+00> : vector<8x128xf32>
    %10 = vector.multi_reduction <add>, %9, %cst [0] : vector<1x8x128xf32> to vector<8x128xf32>
    %11 = arith.addf %7, %10 : vector<8x128xf32>
    %c0_8 = arith.constant 0 : index
    %c0_9 = arith.constant 0 : index
    %12 = vector.load %arg5[%c0_8, %c0_9] : memref<8x128xf32, #tpu.memory_space<vmem>>, vector<8x128xf32>
    tpu.vector_store %arg5[%c0_8, %c0_9], %11 {strides = array<i32>} : memref<8x128xf32, #tpu.memory_space<vmem>>, vector<8x128xf32>,
    %13 = arith.addf %4, %6 : vector<8x128xf32>
    %c0_10 = arith.constant 0 : index
    %c0_11 = arith.constant 0 : index
    %14 = vector.load %arg6[%c0_10, %c0_11] : memref<8x128xf32, #tpu.memory_space<vmem>>, vector<8x128xf32>
    %15 = arith.mulf %13, %13 : vector<8x128xf32>
    %16 = vector.shape_cast %15 : vector<8x128xf32> to vector<1x8x128xf32>
    %cst_12 = arith.constant dense<0.000000e+00> : vector<8x128xf32>
    %17 = vector.multi_reduction <add>, %16, %cst_12 [0] : vector<1x8x128xf32> to vector<8x128xf32>
    %18 = arith.addf %14, %17 : vector<8x128xf32>
    %c0_13 = arith.constant 0 : index
    %c0_14 = arith.constant 0 : index
    %19 = vector.load %arg6[%c0_13, %c0_14] : memref<8x128xf32, #tpu.memory_space<vmem>>, vector<8x128xf32>
    tpu.vector_store %arg6[%c0_13, %c0_14], %18 {strides = array<i32>} : memref<8x128xf32, #tpu.memory_space<vmem>>, vector<8x128xf32>,
    %c0_i32_15 = arith.constant 0 : i32
    %20 = arith.cmpi eq, %arg1, %c0_i32_15 : i32
    %21 = arith.extui %20 : i1 to i32
    %c0_i32_16 = arith.constant 0 : i32
    %22 = arith.cmpi ne, %21, %c0_i32_16 : i32
    scf.if %22 {
      %c0_17 = arith.constant 0 : index
      %c0_18 = arith.constant 0 : index
      %23 = vector.load %arg5[%c0_17, %c0_18] : memref<8x128xf32, #tpu.memory_space<vmem>>, vector<8x128xf32>
      %24 = vector.shape_cast %23 : vector<8x128xf32> to vector<1x8x128xf32>
      %cst_19 = arith.constant dense<0.000000e+00> : vector<1xf32>
      %25 = vector.multi_reduction <add>, %24, %cst_19 [1, 2] : vector<1x8x128xf32> to vector<1xf32>
      %26 = vector.shape_cast %25 : vector<1xf32> to vector<1x1x1xf32>
      %27 = vector.extract %26[0, 0, 0] : f32 from vector<1x1x1xf32>
      %c0_20 = arith.constant 0 : index
      %c0_21 = arith.constant 0 : index
      %28 = vector.load %arg6[%c0_20, %c0_21] : memref<8x128xf32, #tpu.memory_space<vmem>>, vector<8x128xf32>
      %29 = vector.shape_cast %28 : vector<8x128xf32> to vector<1x8x128xf32>
      %cst_22 = arith.constant dense<0.000000e+00> : vector<1xf32>
      %30 = vector.multi_reduction <add>, %29, %cst_22 [1, 2] : vector<1x8x128xf32> to vector<1xf32>
      %31 = vector.shape_cast %30 : vector<1xf32> to vector<1x1x1xf32>
      %32 = vector.extract %31[0, 0, 0] : f32 from vector<1x1x1xf32>
      %cst_23 = arith.constant 2.000000e+00 : f32
      %33 = arith.mulf %cst_23, %27 : f32
      %34 = arith.subf %32, %33 : f32
      %cst_24 = arith.constant 1.000000e+00 : f32
      %35 = arith.addf %27, %cst_24 : f32
      %cst_25 = arith.constant 1.000000e+00 : f32
      %36 = arith.addf %34, %cst_25 : f32
      %37 = arith.divf %35, %36 : f32
      %cst_26 = arith.constant 1.000000e+00 : f32
      %38 = arith.subf %cst_26, %37 : f32
      %39 = vector.broadcast %38 : f32 to vector<1x8x128xf32>
      %c0_27 = arith.constant 0 : index
      %c0_28 = arith.constant 0 : index
      %c0_29 = arith.constant 0 : index
      %40 = vector.load %arg4[%c0_27, %c0_28, %c0_29] : memref<1x8x128xf32, #tpu.memory_space<vmem>>, vector<1x8x128xf32>
      tpu.vector_store %arg4[%c0_27, %c0_28, %c0_29], %39 {strides = array<i32>} : memref<1x8x128xf32, #tpu.memory_space<vmem>>, vector<1x8x128xf32>,
    } else {
    }
    return
  }
  func.func @transform_0(%arg0: i32, %arg1: i32) -> (i32, i32, i32) {
    %c0_i32 = arith.constant 0 : i32
    %c0_i32_0 = arith.constant 0 : i32
    return %arg0, %arg1, %c0_i32 : i32, i32, i32
  }
  func.func @transform_1(%arg0: i32, %arg1: i32) -> (i32, i32, i32) {
    %c0_i32 = arith.constant 0 : i32
    %c0_i32_0 = arith.constant 0 : i32
    return %arg0, %arg1, %c0_i32 : i32, i32, i32
  }
  func.func @transform_2(%arg0: i32, %arg1: i32) -> (i32, i32, i32) {
    %c0_i32 = arith.constant 0 : i32
    %c0_i32_0 = arith.constant 0 : i32
    %c0_i32_1 = arith.constant 0 : i32
    return %arg0, %c0_i32, %c0_i32_0 : i32, i32, i32
  }
}

</mosaic_0001>

<llo_original>
// kernel: tpu_custom_call.1
$region0: #{tpu_custom_call.1}
  #allocation0 [shape = 'u32[]', space=smem, size = 0x4, offset = 0x4, fixed_abs, tag = 'smem constant byte address 0x4 - core index']
  #allocation1 [shape = 'u32[144,128]{1,0:T(1,128)}', space=vmem, size = 0x12000, scoped, tag = 'internal scratch']
  #allocation2 [shape = 'f32[8,128]{1,0:T(8,128)}', space=vmem, size = 0x1000, scoped, tag = 'scratch operand']
  #allocation3 [shape = 'f32[8,128]{1,0:T(8,128)}', space=vmem, size = 0x1000, scoped, tag = 'scratch operand']
  %s0 = inlined_call_operand.hbm [shape: f32[2,8,128], index: 0, kind: input, shape index: {}]
  %s1 = inlined_call_operand.hbm [shape: f32[2,8,128], index: 1, kind: input, shape index: {}]
  %s2 = inlined_call_operand.hbm [shape: f32[2,8,128], index: 2, kind: output, shape index: {}]
  %s3 = sld [smem:[#allocation0]]
  $region57: #{tpu_custom_call.1} parent=0
    _
  %s5 = ssub.s32 1, %s3
  %s6 = scalar_select 0, %s5, %s3
  $region1: #{tpu_custom_call.1} parent=0
    #allocation4 [shape = 'u8[8192]{0}', space=vmem, size = 0x2000, scoped, tag = 'input window, operand 0']
    #allocation5 [shape = 's32[2]{0}', space=sflag, size = 0x8, scoped, tag = 'scoped memory for tpu_custom_call.1']
    #allocation6 [shape = 's32[2]{0}', space=sflag, size = 0x8, scoped, tag = 'scoped memory for tpu_custom_call.1']
    #allocation7 [shape = 'u8[8192]{0}', space=vmem, size = 0x2000, scoped, tag = 'input window, operand 1']
    #allocation8 [shape = 's32[2]{0}', space=sflag, size = 0x8, scoped, tag = 'scoped memory for tpu_custom_call.1']
    #allocation9 [shape = 'u8[8192]{0}', space=vmem, size = 0x2000, scoped, tag = 'output window, operand 0']
    %7 = vsyncpa [#allocation5], 0
    %s8 = scalar_lea.sflag [#allocation5], 1
    %9 = vsyncpa %s8, 0
    %10 = vsyncpa [#allocation8], 0
    %s11 = scalar_lea.sflag [#allocation8], 1
    %12 = vsyncpa %s11, 0
    %13 = vsyncpa [#allocation6], 0
    %s14 = scalar_lea.sflag [#allocation6], 1
    %15 = vsyncpa %s14, 0
    loop: start=0, step=1, limit=4
    $region2: #{tpu_custom_call.1} parent=1 // loop_pre_header
      _
    $region3: #{tpu_custom_call.1} parent=1 // loop_header
      %s17 = sphi 0, %s21
      %p18 = scmp.ge.s32.totalorder %s17, 4
      %s24 = sphi 0, %s36
      %s25 = sphi 0, %s32
      %s26 = sphi 0, %s24
      %s27 = sphi 0, %s25
      %s28 = sphi 0, %s26
      %s29 = sphi 0, %s27
      %s41 = sphi 0, %s43
      %s44 = sphi 0, %s41
      %s45 = sphi 0, %s44
      %s61 = sphi 0, %s45
      %s69 = sphi 0, %s71
      %s72 = sphi 0, %s69
      %s73 = sphi 0, %s72
      %s89 = sphi 0, %s73
      %s95 = sphi 0, %s97
      %s98 = sphi 0, %s95
      %s99 = sphi 0, %s98
      %s115 = sphi 0, %s99
    $region4: #{tpu_custom_call.1} parent=1 // loop_header_branch
      %20 = sbr.rel (%p18) target = $region8
    $region5: #{tpu_custom_call.1} parent=1 // loop_body
      %s22 = ssub.s32 %s17, 1
      %s23 = ssub.s32 %s17, 2
      %s30 = sadd.s32 1, %s25
      %p31 = scmp.ge.s32.totalorder %s30, 1
      %s32 = scalar_select %p31, 0, %s30
      %s33 = sadd.s32 1, %s24
      %s34 = scalar_select %p31, %s33, %s24
      %p35 = scmp.ge.s32.totalorder %s34, 2
      %s36 = scalar_select %p35, 0, %s34
      %s37 = ssub.s32 %s24, %s36
      %s38 = ssub.s32 %s25, %s32
      %s39 = sor.u32 %s37, %s38
      %p40 = scmp.eq.s32.totalorder %s39, 0
      %s42 = sadd.s32 %s41, 1
      %s43 = scalar_select %p40, %s41, %s42
      %p46 = pneg %p40
      %p47 = scmp.eq.s32.totalorder %s17, 1
      %p48 = por %p46, %p47
      %p49 = scmp.ne.s32.totalorder %s41, %s44
      %p50 = scmp.eq.s32.totalorder %s17, 0
      %p51 = por %p49, %p50
      %p52 = scmp.ne.s32.totalorder %s41, %s44
      %p53 = scmp.eq.s32.totalorder %s22, 1
      %p54 = por %p52, %p53
      %p55 = scmp.ne.s32.totalorder %s44, %s45
      %p56 = scmp.eq.s32.totalorder %s22, 0
      %p57 = por %p55, %p56
      %p58 = scmp.ne.s32.totalorder %s44, %s45
      %p59 = scmp.eq.s32.totalorder %s23, 1
      %p60 = por %p58, %p59
      %p62 = scmp.ne.s32.totalorder %s45, %s61
      %p63 = scmp.eq.s32.totalorder %s23, 0
      %p64 = por %p62, %p63
      %s65 = ssub.s32 %s24, %s36
      %s66 = ssub.s32 %s25, %s32
      %s67 = sor.u32 %s65, %s66
      %p68 = scmp.eq.s32.totalorder %s67, 0
      %s70 = sadd.s32 %s69, 1
      %s71 = scalar_select %p68, %s69, %s70
      %p74 = pneg %p68
      %p75 = scmp.eq.s32.totalorder %s17, 1
      %p76 = por %p74, %p75
      %p77 = scmp.ne.s32.totalorder %s69, %s72
      %p78 = scmp.eq.s32.totalorder %s17, 0
      %p79 = por %p77, %p78
      %p80 = scmp.ne.s32.totalorder %s69, %s72
      %p81 = scmp.eq.s32.totalorder %s22, 1
      %p82 = por %p80, %p81
      %p83 = scmp.ne.s32.totalorder %s72, %s73
      %p84 = scmp.eq.s32.totalorder %s22, 0
      %p85 = por %p83, %p84
      %p86 = scmp.ne.s32.totalorder %s72, %s73
      %p87 = scmp.eq.s32.totalorder %s23, 1
      %p88 = por %p86, %p87
      %p90 = scmp.ne.s32.totalorder %s73, %s89
      %p91 = scmp.eq.s32.totalorder %s23, 0
      %p92 = por %p90, %p91
      %s93 = ssub.s32 %s24, %s36
      %p94 = scmp.eq.s32.totalorder %s93, 0
      %s96 = sadd.s32 %s95, 1
      %s97 = scalar_select %p94, %s95, %s96
      %p100 = pneg %p94
      %p101 = scmp.eq.s32.totalorder %s17, 1
      %p102 = por %p100, %p101
      %p103 = scmp.ne.s32.totalorder %s95, %s98
      %p104 = scmp.eq.s32.totalorder %s17, 0
      %p105 = por %p103, %p104
      %p106 = scmp.ne.s32.totalorder %s95, %s98
      %p107 = scmp.eq.s32.totalorder %s22, 1
      %p108 = por %p106, %p107
      %p109 = scmp.ne.s32.totalorder %s98, %s99
      %p110 = scmp.eq.s32.totalorder %s22, 0
      %p111 = por %p109, %p110
      %p112 = scmp.ne.s32.totalorder %s98, %s99
      %p113 = scmp.eq.s32.totalorder %s23, 1
      %p114 = por %p112, %p113
      %p116 = scmp.ne.s32.totalorder %s99, %s115
      %p117 = scmp.eq.s32.totalorder %s23, 0
      %p118 = por %p116, %p117
      %p119 = scmp.le.s32.totalorder 1, %s17
      %p120 = scmp.lt.s32.totalorder %s17, 3
      %p121 = pnand %p119, %p120
      %p122 = pneg %p121
      // Predicated region
      $region9: #{tpu_custom_call.1} parent=5 // pred_check
        _
      $region10: #{tpu_custom_call.1} parent=5 // pred_check_branch
        %124 = sbr.rel (%p121) target = $region12
      $region11: #{tpu_custom_call.1} parent=5 // pred_region
        %s125 = ssub.s32 %s17, 1
      $region12: #{tpu_custom_call.1} parent=5 // pred_fallthru
        _
      %p126 = scmp.lt.s32.totalorder %s17, 2
      // Predicated region
      $region13: #{tpu_custom_call.1} parent=5 // pred_check
        %p127 = pneg %p126
      $region14: #{tpu_custom_call.1} parent=5 // pred_check_branch
        %129 = sbr.rel (%p127) target = $region16
      $region15: #{tpu_custom_call.1} parent=5 // pred_region
        // Predicated region
        $region17: #{tpu_custom_call.1} parent=15 // pred_check
          %p130 = pneg %p51
        $region18: #{tpu_custom_call.1} parent=15 // pred_check_branch
          %132 = sbr.rel (%p130) target = $region20
        $region19: #{tpu_custom_call.1} parent=15 // pred_region
          %s133 = sand.u32 %s41, 1
          %s134 = scalar_lea.sflag [#allocation5], %s133
          %s135 = sand.u32 %s41, 1
          %s136 = smul.addr %s135, 8
          %s137 = scalar_lea.vmem [#allocation4], %s136
          %s139 = ssub.s32 128, 128
          %140 = vsyncadd %s134, %s139
          %s141 = sadd.s32 %s25, %s24
          %s142 = smul.addr %s141, 128
          %s143 = scalar_lea.hbm %s0, %s142
          %s145 = sshll.u32 %s137, 4
          %s146 = int_to_ptr.vmem [resolvable:$true] %s145
          %148 = dma.hbm_to_vmem [thread:$0]  %s143, 128, %s146, %s134
        $region20: #{tpu_custom_call.1} parent=15 // pred_fallthru
          _
        // Predicated region
        $region21: #{tpu_custom_call.1} parent=15 // pred_check
          %p149 = pneg %p79
        $region22: #{tpu_custom_call.1} parent=15 // pred_check_branch
          %151 = sbr.rel (%p149) target = $region24
        $region23: #{tpu_custom_call.1} parent=15 // pred_region
          %s152 = sand.u32 %s69, 1
          %s153 = scalar_lea.sflag [#allocation8], %s152
          %s154 = sand.u32 %s69, 1
          %s155 = smul.addr %s154, 8
          %s156 = scalar_lea.vmem [#allocation7], %s155
          %s158 = ssub.s32 128, 128
          %159 = vsyncadd %s153, %s158
          %s160 = sadd.s32 %s25, %s24
          %s161 = smul.addr %s160, 128
          %s162 = scalar_lea.hbm %s1, %s161
          %s164 = sshll.u32 %s156, 4
          %s165 = int_to_ptr.vmem [resolvable:$true] %s164
          %167 = dma.hbm_to_vmem [thread:$0]  %s162, 128, %s165, %s153
        $region24: #{tpu_custom_call.1} parent=15 // pred_fallthru
          _
      $region16: #{tpu_custom_call.1} parent=5 // pred_fallthru
        _
      %p168 = scmp.le.s32.totalorder 1, %s17
      %p169 = scmp.lt.s32.totalorder %s17, 3
      %p170 = pnand %p168, %p169
      %p171 = pneg %p170
      // Predicated region
      $region25: #{tpu_custom_call.1} parent=5 // pred_check
        _
      $region26: #{tpu_custom_call.1} parent=5 // pred_check_branch
        %173 = sbr.rel (%p170) target = $region28
      $region27: #{tpu_custom_call.1} parent=5 // pred_region
        %s174 = ssub.s32 %s17, 1
        %s175 = sand.u32 %s44, 1
        %s176 = scalar_lea.sflag [#allocation5], %s175
        %s177 = sand.u32 %s44, 1
        %s178 = smul.addr %s177, 8
        %s179 = scalar_lea.vmem [#allocation4], %s178
        // Predicated region
        $region29: #{tpu_custom_call.1} parent=27 // pred_check
          %p180 = pneg %p57
        $region30: #{tpu_custom_call.1} parent=27 // pred_check_branch
          %182 = sbr.rel (%p180) target = $region32
        $region31: #{tpu_custom_call.1} parent=27 // pred_region
          %183 = dma.done %s176, 128
        $region32: #{tpu_custom_call.1} parent=27 // pred_fallthru
          _
        %s184 = sand.u32 %s72, 1
        %s185 = scalar_lea.sflag [#allocation8], %s184
        %s186 = sand.u32 %s72, 1
        %s187 = smul.addr %s186, 8
        %s188 = scalar_lea.vmem [#allocation7], %s187
        // Predicated region
        $region33: #{tpu_custom_call.1} parent=27 // pred_check
          %p189 = pneg %p85
        $region34: #{tpu_custom_call.1} parent=27 // pred_check_branch
          %191 = sbr.rel (%p189) target = $region36
        $region35: #{tpu_custom_call.1} parent=27 // pred_region
          %192 = dma.done %s185, 128
        $region36: #{tpu_custom_call.1} parent=27 // pred_fallthru
          _
        %s193 = sand.u32 %s44, 1
        %s194 = scalar_lea.sflag [#allocation5], %s193
        %s195 = sand.u32 %s44, 1
        %s196 = smul.addr %s195, 8
        %s197 = scalar_lea.vmem [#allocation4], %s196
        %p198 = pneg %p57
        %p199 = pneg %p54
        %s200 = sand.u32 %s72, 1
        %s201 = scalar_lea.sflag [#allocation8], %s200
        %s202 = sand.u32 %s72, 1
        %s203 = smul.addr %s202, 8
        %s204 = scalar_lea.vmem [#allocation7], %s203
        %p205 = pneg %p85
        %p206 = pneg %p82
        %p207 = pneg %p111
        %p208 = pneg %p108
        %s209 = sand.u32 %s98, 1
        %s210 = scalar_lea.sflag [#allocation6], %s209
        %s211 = sand.u32 %s98, 1
        %s212 = smul.addr %s211, 8
        %s213 = scalar_lea.vmem [#allocation9], %s212
        %p214 = scmp.eq.s32.totalorder %s27, 0
        // Predicated region
        $region37: #{tpu_custom_call.1} parent=27 // pred_check
          %p215 = pneg %p214
        $region38: #{tpu_custom_call.1} parent=27 // pred_check_branch
          %217 = sbr.rel (%p215) target = $region40
        $region39: #{tpu_custom_call.1} parent=27 // pred_region
          %218 = vst [vmem:[#allocation2] sm:$0xff] 0.0
          %219 = vst [vmem:[#allocation3] sm:$0xff] 0.0
        $region40: #{tpu_custom_call.1} parent=27 // pred_fallthru
          _
        %v220 = vld [vmem:[%s179] sm:$0xff]
        %v221 = vld [vmem:[%s188] sm:$0xff]
        %v222 = vld [vmem:[#allocation2] sm:$0xff]
        %v223 = vmul.f32 %v220, %v221
        %v224 = vadd.f32 %v223, 0.0
        %v225 = vadd.f32 %v222, %v224
        %226 = vst [vmem:[#allocation2] sm:$0xff] %v225
        %v227 = vadd.f32 %v220, %v221
        %v228 = vld [vmem:[#allocation3] sm:$0xff]
        %v229 = vmul.f32 %v227, %v227
        %v230 = vadd.f32 %v229, 0.0
        %v231 = vadd.f32 %v228, %v230
        %232 = vst [vmem:[#allocation3] sm:$0xff] %v231
        // Predicated region
        $region41: #{tpu_custom_call.1} parent=27 // pred_check
          %p233 = pneg %p214
        $region42: #{tpu_custom_call.1} parent=27 // pred_check_branch
          %235 = sbr.rel (%p233) target = $region44
        $region43: #{tpu_custom_call.1} parent=27 // pred_region
          %v236 = vld [vmem:[#allocation2] sm:$0xff]
          %237 = vadd.xlane.f32.xlu0 %v236
          %v238 = vpop.xlane.xlu0 %237
          %v239 = vrot.slane %v238, 4
          %v240 = vadd.f32 %v238, %v239
          %v241 = vrot.slane %v240, 2
          %v242 = vadd.f32 %v240, %v241
          %v243 = vrot.slane %v242, 1
          %v244 = vadd.f32 %v242, %v243
          %s245 = vtos %v244
          %v246 = vld [vmem:[#allocation3] sm:$0xff]
          %247 = vadd.xlane.f32.xlu0 %v246
          %v248 = vpop.xlane.xlu0 %247
          %v249 = vrot.slane %v248, 4
          %v250 = vadd.f32 %v248, %v249
          %v251 = vrot.slane %v250, 2
          %v252 = vadd.f32 %v250, %v251
          %v253 = vrot.slane %v252, 1
          %v254 = vadd.f32 %v252, %v253
          %s255 = vtos %v254
          %s256 = smul.f32 %s245, 2.0
          %s257 = ssub.f32 %s255, %s256
          %s258 = sadd.f32 %s245, 1.0
          %s259 = sadd.f32 %s257, 1.0
          %v260 = vstv %s259
          %v261 = vrcp.pop %v260
          %s262 = vtos %v261
          %s263 = smul.f32 %s258, %s262
          %s264 = ssub.f32 1.0, %s263
          %v265 = vstv %s264
          %266 = vst [vmem:[%s213] sm:$0xff] %v265
        $region44: #{tpu_custom_call.1} parent=27 // pred_fallthru
          _
        %s267 = sand.u32 %s98, 1
        %s268 = scalar_lea.sflag [#allocation6], %s267
        %s269 = sand.u32 %s98, 1
        %s270 = smul.addr %s269, 8
        %s271 = scalar_lea.vmem [#allocation9], %s270
        // Predicated region
        $region45: #{tpu_custom_call.1} parent=27 // pred_check
          %p272 = pneg %p108
        $region46: #{tpu_custom_call.1} parent=27 // pred_check_branch
          %274 = sbr.rel (%p272) target = $region48
        $region47: #{tpu_custom_call.1} parent=27 // pred_region
          %s276 = ssub.s32 128, 128
          %277 = vsyncadd %s268, %s276
          %s278 = smul.addr %s26, 128
          %s279 = scalar_lea.hbm %s2, %s278
          %s281 = sshll.u32 %s271, 4
          %s282 = int_to_ptr.vmem [resolvable:$true] %s281
          %284 = dma.vmem_to_hbm [thread:$0]  %s282, 128, %s279, %s268
        $region48: #{tpu_custom_call.1} parent=27 // pred_fallthru
          _
      $region28: #{tpu_custom_call.1} parent=5 // pred_fallthru
        _
      %p285 = scmp.le.s32.totalorder 2, %s17
      // Predicated region
      $region49: #{tpu_custom_call.1} parent=5 // pred_check
        %p286 = pneg %p285
      $region50: #{tpu_custom_call.1} parent=5 // pred_check_branch
        %288 = sbr.rel (%p286) target = $region52
      $region51: #{tpu_custom_call.1} parent=5 // pred_region
        %s289 = ssub.s32 %s17, 2
        // Predicated region
        $region53: #{tpu_custom_call.1} parent=51 // pred_check
          %p290 = pneg %p114
        $region54: #{tpu_custom_call.1} parent=51 // pred_check_branch
          %292 = sbr.rel (%p290) target = $region56
        $region55: #{tpu_custom_call.1} parent=51 // pred_region
          %s293 = sand.u32 %s99, 1
          %s294 = scalar_lea.sflag [#allocation6], %s293
          %s295 = sand.u32 %s99, 1
          %s296 = smul.addr %s295, 8
          %s297 = scalar_lea.vmem [#allocation9], %s296
          %298 = dma.done %s294, 128
        $region56: #{tpu_custom_call.1} parent=51 // pred_fallthru
          _
      $region52: #{tpu_custom_call.1} parent=5 // pred_fallthru
        _
    $region6: #{tpu_custom_call.1} parent=1 // loop_footer
      %s21 = sadd.s32 1, %s17
    $region7: #{tpu_custom_call.1} parent=1 // loop_footer_branch
      %16 = sbr.rel target = $region3
    $region8: #{tpu_custom_call.1} parent=1 // loop_exit
      _
    %299 = vsyncpa [#allocation5], 1
    %s300 = scalar_lea.sflag [#allocation5], 1
    %301 = vsyncpa %s300, 1
    %302 = vsyncpa [#allocation8], 1
    %s303 = scalar_lea.sflag [#allocation8], 1
    %304 = vsyncpa %s303, 1
    %305 = vsyncpa [#allocation6], 1
    %s306 = scalar_lea.sflag [#allocation6], 1
    %307 = vsyncpa %s306, 1

</llo_original>
